<compile_context>
chip_gen: v6e
topology: v6e:2x2x1
jax: 0.10.0
libtpu: 0.0.40
codegen_flags: <defaults>
</compile_context>

<pallas_src>
import numpy as np
import jax
import jax.numpy as jnp
from jax.experimental import pallas as pl
from jax.experimental.pallas import tpu as pltpu


def _dtls_kernel(x_ref, a_ref, aw1_ref, temb_ref, b1_ref, w2_ref, b2_ref,
                 recon_ref, err_ref):
    # x_ref:    (TB, C*H, W)  f32   channels stacked on the sublane axis
    # a_ref:    (TB, H, H)    bf16  symmetric block-average blur per sample
    # aw1_ref:  (TB, W, K)    bf16  A_t @ W1 per sample (fused col-blur + W1)
    # temb_ref: (TB, 1, K)    f32
    # b1_ref:   (1, K) f32 ; w2_ref: (K, W) bf16 ; b2_ref: (1, W) f32
    TB, CH, W = x_ref.shape
    H = a_ref.shape[-1]
    C = CH // H
    K = w2_ref.shape[0]

    x_f32 = x_ref[...]                              # kept in f32 for the loss
    x_bf = x_f32.astype(jnp.bfloat16)
    a_bf = a_ref[...]                               # (TB, H, H)
    aw1_bf = aw1_ref[...]                           # (TB, W, K)

    # ---- (A x_c A) W1 == A (x_c (A W1)):  right factor first, all channels
    # stacked on the row axis -> one batched MXU matmul with M = C*H ---------
    v = jnp.einsum('brw,bwk->brk', x_bf, aw1_bf,
                   preferred_element_type=jnp.float32)          # (TB, CH, K)

    # ---- row blur: apply the small per-sample A_t to each channel block ----
    blur_parts = []
    for c in range(C):                                          # static, C small
        v_c = v[:, c * H:(c + 1) * H, :].astype(jnp.bfloat16)   # (TB, H, K)
        blur_parts.append(
            jnp.einsum('bij,bjk->bik', a_bf, v_c,
                       preferred_element_type=jnp.float32))     # (TB, H, K)
    blur = jnp.concatenate(blur_parts, axis=1)                  # (TB, CH, K)

    # ---- bias + time embedding + ReLU (f32) --------------------------------
    h = blur + b1_ref[...][None] + temb_ref[...]
    h = jnp.maximum(h, 0.0)

    # ---- shared second layer: one 2-D MXU matmul with M = TB*CH rows -------
    r = jnp.dot(h.reshape(TB * CH, K).astype(jnp.bfloat16), w2_ref[...],
                preferred_element_type=jnp.float32)
    r = (r + b2_ref[...]).reshape(TB, CH, W)                    # f32

    recon_ref[...] = r.astype(recon_ref.dtype)                  # bf16 store

    # ---- per-tile sum of squared error (MSE numerator), f32 ----------------
    diff = r - x_f32
    sse = jnp.sum(diff * diff)
    err_ref[...] = jnp.full(err_ref.shape, sse, jnp.float32)


def _padded_bytes(sub, lane, itemsize):
    """VMEM footprint of one (sub, lane) tile after (8, 128) padding."""
    return ((sub + 7) // 8) * 8 * ((lane + 127) // 128) * 128 * itemsize


def _per_sample_vmem_bytes(C, H, W, K):
    b = 0
    b += _padded_bytes(C * H, W, 4)   # x block, f32
    b += _padded_bytes(H, H, 2)       # A_t, bf16
    b += _padded_bytes(W, K, 2)       # A_t @ W1, bf16
    b += _padded_bytes(1, K, 4)       # temb, f32
    b += _padded_bytes(C * H, W, 2)   # recon block, bf16
    return b


def _pick_tb(B, per_sample_bytes, *, vmem_budget_bytes=16 << 20, tb_cap=256):
    """Largest divisor of B that (a) leaves >=2 grid steps (both TCs on v7x),
    (b) fits the double-buffered VMEM budget, (c) respects a sanity cap."""
    best = 1
    for d in range(1, B + 1):
        if B % d:
            continue
        if d > tb_cap:
            continue
        if B >= 2 and B // d < 2:
            continue
        if 2 * d * per_sample_bytes > vmem_budget_bytes:
            continue
        best = d
    return best


def dtls_forward(x, t, a_table, aw1_table, temb_table, b1, w2, b2, *,
                 tb=None, recon_dtype=jnp.float32):
    """Returns (loss, x_recon) exactly like DTLS.forward -> p_losses."""
    B, C, H, W = x.shape
    CH = C * H
    K = w2.shape[0]

    if tb is None:
        tb = _pick_tb(B, _per_sample_vmem_bytes(C, H, W, K))
    assert B % tb == 0
    num_tiles = B // tb

    # wrapper-side layout plumbing (free) + tiny per-sample operator gathers
    x2 = x.reshape(B, CH, W)                                # f32
    a_b = a_table[t].astype(jnp.bfloat16)                   # (B, H, H)
    aw1_b = aw1_table[t].astype(jnp.bfloat16)               # (B, W, K)
    temb_b = temb_table[t][:, None, :]                      # (B, 1, K) f32
    w2_bf = w2.astype(jnp.bfloat16)                         # (K, W)

    grid_spec = pltpu.PrefetchScalarGridSpec(
        num_scalar_prefetch=0,
        grid=(num_tiles,),
        in_specs=[
            pl.BlockSpec((tb, CH, W), lambda i: (i, 0, 0)),     # x
            pl.BlockSpec((tb, H, H), lambda i: (i, 0, 0)),      # A_t
            pl.BlockSpec((tb, W, K), lambda i: (i, 0, 0)),      # A_t @ W1
            pl.BlockSpec((tb, 1, K), lambda i: (i, 0, 0)),      # temb_t
            pl.BlockSpec((1, K), lambda i: (0, 0)),             # b1
            pl.BlockSpec((K, W), lambda i: (0, 0)),             # W2
            pl.BlockSpec((1, W), lambda i: (0, 0)),             # b2
        ],
        out_specs=[
            pl.BlockSpec((tb, CH, W), lambda i: (i, 0, 0)),     # recon (bf16)
            pl.BlockSpec((1, 1, 128), lambda i: (i, 0, 0)),     # per-tile SSE
        ],
    )

    recon2, err = pl.pallas_call(
        _dtls_kernel,
        grid_spec=grid_spec,
        out_shape=[
            jax.ShapeDtypeStruct((B, CH, W), jnp.bfloat16),
            jax.ShapeDtypeStruct((num_tiles, 1, 128), jnp.float32),
        ],
        compiler_params=pltpu.CompilerParams(
            dimension_semantics=("parallel",),
            vmem_limit_bytes=32 * 1024 * 1024),
    )(x2, a_b, aw1_b, temb_b, b1, w2_bf, b2)

    recon = recon2.reshape(B, C, H, W).astype(recon_dtype)
    loss = jnp.sum(err[:, 0, 0]) / (B * C * H * W)   # nn.MSELoss 'mean'
    return loss, recon


def make_blur_matrices(image_size, size_list):
    """A[s] = symmetric block-average matrix for target size size_list[s]."""
    mats = []
    for s in size_list:
        scale = image_size // s
        idx = np.arange(image_size) // scale
        A = (idx[:, None] == idx[None, :]).astype(np.float32) / float(scale)
        mats.append(A)
    return np.stack(mats, axis=0)                     # (T+1, S, S)


def make_operator_tables(image_size, size_list, w1):
    """A_table[t] = blur matrix,  AW1_table[t] = A_t @ W1 (fused col blur)."""
    A = make_blur_matrices(image_size, size_list)            # (T+1, S, S)
    AW1 = jnp.einsum('tij,jk->tik', jnp.asarray(A), w1)      # (T+1, S, K)
    return jnp.asarray(A), AW1


if __name__ == "__main__":
    B, C, IMAGE_SIZE = 2, 4, 16
    HIDDEN = 32
    TIMESTEPS = 3
    size_list = [16, 8, 4, 2]   # size_list[t] = downsample target at step t

    key = jax.random.PRNGKey(0)
    k_x, k_t, k_w1, k_b1, k_w2, k_b2, k_e = jax.random.split(key, 7)

    x = jax.random.normal(k_x, (B, C, IMAGE_SIZE, IMAGE_SIZE), jnp.float32)
    # t ~ Uniform{1, ..., TIMESTEPS}  (matches torch.randint(1, T+1, (b,)))
    t = jax.random.randint(k_t, (B,), 1, TIMESTEPS + 1)

    # deterministic synthetic denoise_fn parameters
    w1 = jax.random.normal(k_w1, (IMAGE_SIZE, HIDDEN), jnp.float32) * 0.1
    b1 = jax.random.normal(k_b1, (1, HIDDEN), jnp.float32) * 0.01
    w2 = jax.random.normal(k_w2, (HIDDEN, IMAGE_SIZE), jnp.float32) * 0.1
    b2 = jax.random.normal(k_b2, (1, IMAGE_SIZE), jnp.float32) * 0.01
    temb_table = jax.random.normal(k_e, (TIMESTEPS + 1, HIDDEN), jnp.float32) * 0.1

    a_table, aw1_table = make_operator_tables(IMAGE_SIZE, size_list, w1)

    fwd = jax.jit(dtls_forward)
    loss, recon = fwd(x, t, a_table, aw1_table, temb_table, b1, w2, b2)
    jax.block_until_ready((loss, recon))
    print("KERNEL_OK")
</pallas_src>

<mosaic_0001>
module attributes {stable_mosaic.version = 11 : i64} {
  func.func @_dtls_kernel(%arg0: i32, %arg1: memref<1x64x16xf32, #tpu.memory_space<vmem>>, %arg2: memref<1x16x16xbf16, #tpu.memory_space<vmem>>, %arg3: memref<1x16x32xbf16, #tpu.memory_space<vmem>>, %arg4: memref<1x1x32xf32, #tpu.memory_space<vmem>>, %arg5: memref<1x32xf32, #tpu.memory_space<vmem>>, %arg6: memref<32x16xbf16, #tpu.memory_space<vmem>>, %arg7: memref<1x16xf32, #tpu.memory_space<vmem>>, %arg8: memref<1x64x16xbf16, #tpu.memory_space<vmem>>, %arg9: memref<1x1x128xf32, #tpu.memory_space<vmem>>) attributes {dimension_semantics = [#tpu.dimension_semantics<parallel>], iteration_bounds = array<i64: 2>, scalar_prefetch = 0 : i64, scratch_operands = 0 : i64, tpu.core_type = #tpu.core_type<tc>, window_params = [{transform_indices = @transform_0, window_bounds = array<i64: 1, 64, 16>}, {transform_indices = @transform_1, window_bounds = array<i64: 1, 16, 16>}, {transform_indices = @transform_2, window_bounds = array<i64: 1, 16, 32>}, {transform_indices = @transform_3, window_bounds = array<i64: 1, 1, 32>}, {pipeline_mode = #tpu.pipeline_mode<synchronous>, transform_indices = @transform_4, window_bounds = array<i64: 1, 32>}, {pipeline_mode = #tpu.pipeline_mode<synchronous>, transform_indices = @transform_5, window_bounds = array<i64: 32, 16>}, {pipeline_mode = #tpu.pipeline_mode<synchronous>, transform_indices = @transform_6, window_bounds = array<i64: 1, 16>}, {transform_indices = @transform_7, window_bounds = array<i64: 1, 64, 16>}, {transform_indices = @transform_8, window_bounds = array<i64: 1, 1, 128>}]} {
    %c0 = arith.constant 0 : index
    %c0_0 = arith.constant 0 : index
    %c0_1 = arith.constant 0 : index
    %0 = vector.load %arg1[%c0, %c0_0, %c0_1] : memref<1x64x16xf32, #tpu.memory_space<vmem>>, vector<1x64x16xf32>
    %1 = arith.truncf %0 : vector<1x64x16xf32> to vector<1x64x16xbf16>
    %c0_2 = arith.constant 0 : index
    %c0_3 = arith.constant 0 : index
    %c0_4 = arith.constant 0 : index
    %2 = vector.load %arg2[%c0_2, %c0_3, %c0_4] : memref<1x16x16xbf16, #tpu.memory_space<vmem>>, vector<1x16x16xbf16>
    %c0_5 = arith.constant 0 : index
    %c0_6 = arith.constant 0 : index
    %c0_7 = arith.constant 0 : index
    %3 = vector.load %arg3[%c0_5, %c0_6, %c0_7] : memref<1x16x32xbf16, #tpu.memory_space<vmem>>, vector<1x16x32xbf16>
    "tpu.trace_start"() <{level = 10 : i32, message = "brw,bwk->brk"}> : () -> ()
    %cst = arith.constant dense<0.000000e+00> : vector<1x64x32xf32>
    %4 = tpu.matmul %1, %3, %cst {dimension_numbers = #tpu.dot_dimension_numbers<[2], [1], [1], [2], [0, 0, 0, 1, 1, 2], [0], [0]>} : vector<1x64x16xbf16>, vector<1x16x32xbf16>, vector<1x64x32xf32> -> vector<1x64x32xf32>
    "tpu.trace_stop"() : () -> ()
    %5 = vector.extract_strided_slice %4 {offsets = [0, 0, 0], sizes = [1, 16, 32], strides = [1, 1, 1]} : vector<1x64x32xf32> to vector<1x16x32xf32>
    %6 = arith.truncf %5 : vector<1x16x32xf32> to vector<1x16x32xbf16>
    "tpu.trace_start"() <{level = 10 : i32, message = "bij,bjk->bik"}> : () -> ()
    %cst_8 = arith.constant dense<0.000000e+00> : vector<1x16x32xf32>
    %7 = tpu.matmul %2, %6, %cst_8 {dimension_numbers = #tpu.dot_dimension_numbers<[2], [1], [1], [2], [0, 0, 0, 1, 1, 2], [0], [0]>} : vector<1x16x16xbf16>, vector<1x16x32xbf16>, vector<1x16x32xf32> -> vector<1x16x32xf32>
    "tpu.trace_stop"() : () -> ()
    %8 = vector.extract_strided_slice %4 {offsets = [0, 16, 0], sizes = [1, 16, 32], strides = [1, 1, 1]} : vector<1x64x32xf32> to vector<1x16x32xf32>
    %9 = arith.truncf %8 : vector<1x16x32xf32> to vector<1x16x32xbf16>
    "tpu.trace_start"() <{level = 10 : i32, message = "bij,bjk->bik"}> : () -> ()
    %cst_9 = arith.constant dense<0.000000e+00> : vector<1x16x32xf32>
    %10 = tpu.matmul %2, %9, %cst_9 {dimension_numbers = #tpu.dot_dimension_numbers<[2], [1], [1], [2], [0, 0, 0, 1, 1, 2], [0], [0]>} : vector<1x16x16xbf16>, vector<1x16x32xbf16>, vector<1x16x32xf32> -> vector<1x16x32xf32>
    "tpu.trace_stop"() : () -> ()
    %11 = vector.extract_strided_slice %4 {offsets = [0, 32, 0], sizes = [1, 16, 32], strides = [1, 1, 1]} : vector<1x64x32xf32> to vector<1x16x32xf32>
    %12 = arith.truncf %11 : vector<1x16x32xf32> to vector<1x16x32xbf16>
    "tpu.trace_start"() <{level = 10 : i32, message = "bij,bjk->bik"}> : () -> ()
    %cst_10 = arith.constant dense<0.000000e+00> : vector<1x16x32xf32>
    %13 = tpu.matmul %2, %12, %cst_10 {dimension_numbers = #tpu.dot_dimension_numbers<[2], [1], [1], [2], [0, 0, 0, 1, 1, 2], [0], [0]>} : vector<1x16x16xbf16>, vector<1x16x32xbf16>, vector<1x16x32xf32> -> vector<1x16x32xf32>
    "tpu.trace_stop"() : () -> ()
    %14 = vector.extract_strided_slice %4 {offsets = [0, 48, 0], sizes = [1, 16, 32], strides = [1, 1, 1]} : vector<1x64x32xf32> to vector<1x16x32xf32>
    %15 = arith.truncf %14 : vector<1x16x32xf32> to vector<1x16x32xbf16>
    "tpu.trace_start"() <{level = 10 : i32, message = "bij,bjk->bik"}> : () -> ()
    %cst_11 = arith.constant dense<0.000000e+00> : vector<1x16x32xf32>
    %16 = tpu.matmul %2, %15, %cst_11 {dimension_numbers = #tpu.dot_dimension_numbers<[2], [1], [1], [2], [0, 0, 0, 1, 1, 2], [0], [0]>} : vector<1x16x16xbf16>, vector<1x16x32xbf16>, vector<1x16x32xf32> -> vector<1x16x32xf32>
    "tpu.trace_stop"() : () -> ()
    %17 = tpu.concatenate %7, %10, %13, %16 in 1 : vector<1x16x32xf32>, vector<1x16x32xf32>, vector<1x16x32xf32>, vector<1x16x32xf32> -> vector<1x64x32xf32>
    %c0_12 = arith.constant 0 : index
    %c0_13 = arith.constant 0 : index
    %18 = vector.load %arg5[%c0_12, %c0_13] : memref<1x32xf32, #tpu.memory_space<vmem>>, vector<1x32xf32>
    %19 = vector.shape_cast %18 : vector<1x32xf32> to vector<1x1x32xf32>
    %20 = vector.broadcast %19 : vector<1x1x32xf32> to vector<1x64x32xf32>
    %21 = arith.addf %17, %20 : vector<1x64x32xf32>
    %c0_14 = arith.constant 0 : index
    %c0_15 = arith.constant 0 : index
    %c0_16 = arith.constant 0 : index
    %22 = vector.load %arg4[%c0_14, %c0_15, %c0_16] : memref<1x1x32xf32, #tpu.memory_space<vmem>>, vector<1x1x32xf32>
    %23 = vector.broadcast %22 : vector<1x1x32xf32> to vector<1x64x32xf32>
    %24 = arith.addf %21, %23 : vector<1x64x32xf32>
    %cst_17 = arith.constant 0.000000e+00 : f32
    %25 = vector.broadcast %cst_17 : f32 to vector<1x64x32xf32>
    %26 = arith.maximumf %24, %25 : vector<1x64x32xf32>
    %27 = vector.shape_cast %26 : vector<1x64x32xf32> to vector<64x32xf32>
    %28 = arith.truncf %27 : vector<64x32xf32> to vector<64x32xbf16>
    %c0_18 = arith.constant 0 : index
    %c0_19 = arith.constant 0 : index
    %29 = vector.load %arg6[%c0_18, %c0_19] : memref<32x16xbf16, #tpu.memory_space<vmem>>, vector<32x16xbf16>
    %cst_20 = arith.constant dense<0.000000e+00> : vector<64x16xf32>
    %30 = tpu.matmul %28, %29, %cst_20 {dimension_numbers = #tpu.dot_dimension_numbers<[1], [0], [0], [1], [0, 0, 1, 1], [], []>} : vector<64x32xbf16>, vector<32x16xbf16>, vector<64x16xf32> -> vector<64x16xf32>
    %c0_21 = arith.constant 0 : index
    %c0_22 = arith.constant 0 : index
    %31 = vector.load %arg7[%c0_21, %c0_22] : memref<1x16xf32, #tpu.memory_space<vmem>>, vector<1x16xf32>
    %32 = vector.broadcast %31 : vector<1x16xf32> to vector<64x16xf32>
    %33 = arith.addf %30, %32 : vector<64x16xf32>
    %34 = vector.shape_cast %33 : vector<64x16xf32> to vector<1x64x16xf32>
    %35 = arith.truncf %34 : vector<1x64x16xf32> to vector<1x64x16xbf16>
    %c0_23 = arith.constant 0 : index
    %c0_24 = arith.constant 0 : index
    %c0_25 = arith.constant 0 : index
    %36 = vector.load %arg8[%c0_23, %c0_24, %c0_25] : memref<1x64x16xbf16, #tpu.memory_space<vmem>>, vector<1x64x16xbf16>
    tpu.vector_store %arg8[%c0_23, %c0_24, %c0_25], %35 {strides = array<i32>} : memref<1x64x16xbf16, #tpu.memory_space<vmem>>, vector<1x64x16xbf16>,
    %37 = arith.subf %34, %0 : vector<1x64x16xf32>
    %38 = arith.mulf %37, %37 : vector<1x64x16xf32>
    %39 = vector.shape_cast %38 : vector<1x64x16xf32> to vector<1x1x64x16xf32>
    %cst_26 = arith.constant dense<0.000000e+00> : vector<1xf32>
    %40 = vector.multi_reduction <add>, %39, %cst_26 [1, 2, 3] : vector<1x1x64x16xf32> to vector<1xf32>
    %41 = vector.shape_cast %40 : vector<1xf32> to vector<1x1x1x1xf32>
    %42 = vector.extract %41[0, 0, 0, 0] : f32 from vector<1x1x1x1xf32>
    %43 = vector.broadcast %42 : f32 to vector<1x1x128xf32>
    %c0_27 = arith.constant 0 : index
    %c0_28 = arith.constant 0 : index
    %c0_29 = arith.constant 0 : index
    %44 = vector.load %arg9[%c0_27, %c0_28, %c0_29] : memref<1x1x128xf32, #tpu.memory_space<vmem>>, vector<1x1x128xf32>
    tpu.vector_store %arg9[%c0_27, %c0_28, %c0_29], %43 {strides = array<i32>} : memref<1x1x128xf32, #tpu.memory_space<vmem>>, vector<1x1x128xf32>,
    return
  }
  func.func @transform_0(%arg0: i32) -> (i32, i32, i32) {
    %c0_i32 = arith.constant 0 : i32
    %c0_i32_0 = arith.constant 0 : i32
    %c0_i32_1 = arith.constant 0 : i32
    return %arg0, %c0_i32, %c0_i32_0 : i32, i32, i32
  }
  func.func @transform_1(%arg0: i32) -> (i32, i32, i32) {
    %c0_i32 = arith.constant 0 : i32
    %c0_i32_0 = arith.constant 0 : i32
    %c0_i32_1 = arith.constant 0 : i32
    return %arg0, %c0_i32, %c0_i32_0 : i32, i32, i32
  }
  func.func @transform_2(%arg0: i32) -> (i32, i32, i32) {
    %c0_i32 = arith.constant 0 : i32
    %c0_i32_0 = arith.constant 0 : i32
    %c0_i32_1 = arith.constant 0 : i32
    return %arg0, %c0_i32, %c0_i32_0 : i32, i32, i32
  }
  func.func @transform_3(%arg0: i32) -> (i32, i32, i32) {
    %c0_i32 = arith.constant 0 : i32
    %c0_i32_0 = arith.constant 0 : i32
    %c0_i32_1 = arith.constant 0 : i32
    return %arg0, %c0_i32, %c0_i32_0 : i32, i32, i32
  }
  func.func @transform_4(%arg0: i32) -> (i32, i32) {
    %c0_i32 = arith.constant 0 : i32
    %c0_i32_0 = arith.constant 0 : i32
    %c0_i32_1 = arith.constant 0 : i32
    return %c0_i32, %c0_i32_0 : i32, i32
  }
  func.func @transform_5(%arg0: i32) -> (i32, i32) {
    %c0_i32 = arith.constant 0 : i32
    %c0_i32_0 = arith.constant 0 : i32
    %c0_i32_1 = arith.constant 0 : i32
    return %c0_i32, %c0_i32_0 : i32, i32
  }
  func.func @transform_6(%arg0: i32) -> (i32, i32) {
    %c0_i32 = arith.constant 0 : i32
    %c0_i32_0 = arith.constant 0 : i32
    %c0_i32_1 = arith.constant 0 : i32
    return %c0_i32, %c0_i32_0 : i32, i32
  }
  func.func @transform_7(%arg0: i32) -> (i32, i32, i32) {
    %c0_i32 = arith.constant 0 : i32
    %c0_i32_0 = arith.constant 0 : i32
    %c0_i32_1 = arith.constant 0 : i32
    return %arg0, %c0_i32, %c0_i32_0 : i32, i32, i32
  }
  func.func @transform_8(%arg0: i32) -> (i32, i32, i32) {
    %c0_i32 = arith.constant 0 : i32
    %c0_i32_0 = arith.constant 0 : i32
    %c0_i32_1 = arith.constant 0 : i32
    return %arg0, %c0_i32, %c0_i32_0 : i32, i32, i32
  }
}

</mosaic_0001>

<llo_original>
// kernel: dtls_forward.1
$region0: #{dtls_forward.1}
  #allocation0 [shape = 'u32[]', space=smem, size = 0x4, offset = 0x4, fixed_abs, tag = 'smem constant byte address 0x4 - core index']
  #allocation1 [shape = 'u32[144,128]{1,0:T(1,128)}', space=vmem, size = 0x12000, scoped, tag = 'internal scratch']
  %s0 = inlined_call_operand.vmem [shape: f32[2,64,16], index: 0, kind: input, shape index: {}]
  %s1 = inlined_call_operand.vmem [shape: bf16[2,16,16], index: 1, kind: input, shape index: {}]
  %s2 = inlined_call_operand.vmem [shape: bf16[2,16,32], index: 2, kind: input, shape index: {}]
  %s3 = inlined_call_operand.vmem [shape: f32[2,1,32], index: 3, kind: input, shape index: {}]
  %s4 = inlined_call_operand.vmem [shape: f32[1,32], index: 4, kind: input, shape index: {}]
  %s5 = inlined_call_operand.vmem [shape: bf16[32,16], index: 5, kind: input, shape index: {}]
  %s6 = inlined_call_operand.vmem [shape: f32[1,16], index: 6, kind: input, shape index: {}]
  %s7 = inlined_call_operand.vmem [shape: bf16[2,64,16], index: 7, kind: output, shape index: {0}]
  %s8 = inlined_call_operand.vmem [shape: f32[2,1,128], index: 8, kind: output, shape index: {1}]
  %9 = xla_tuple %s7, %s8
  %s10 = sld [smem:[#allocation0]]
  $region69: #{dtls_forward.1} parent=0
    _
  %s12 = ssub.s32 1, %s10
  %s13 = scalar_select 0, %s12, %s10
  loop: start=0, step=1, limit=4
  $region2: #{dtls_forward.1} parent=0 // loop_pre_header
    _
  $region3: #{dtls_forward.1} parent=0 // loop_header
    %s15 = sphi 0, %s19
    %p16 = scmp.ge.s32.totalorder %s15, 4
    %s25 = sphi 0, %s27
    %s28 = sphi 0, %s25
    %s29 = sphi 0, %s28
    %s45 = sphi 0, %s29
    %s51 = sphi 0, %s53
    %s54 = sphi 0, %s51
    %s55 = sphi 0, %s54
    %s71 = sphi 0, %s55
    %s77 = sphi 0, %s79
    %s80 = sphi 0, %s77
    %s81 = sphi 0, %s80
    %s97 = sphi 0, %s81
    %s103 = sphi 0, %s105
    %s106 = sphi 0, %s103
    %s107 = sphi 0, %s106
    %s123 = sphi 0, %s107
    %s127 = sphi 0, %s127
    %s129 = sphi 0, %s127
    %s130 = sphi 0, %s129
    %s144 = sphi 0, %s130
    %s148 = sphi 0, %s148
    %s150 = sphi 0, %s148
    %s151 = sphi 0, %s150
    %s165 = sphi 0, %s151
    %s169 = sphi 0, %s169
    %s171 = sphi 0, %s169
    %s172 = sphi 0, %s171
    %s186 = sphi 0, %s172
    %s192 = sphi 0, %s194
    %s195 = sphi 0, %s192
    %s196 = sphi 0, %s195
    %s212 = sphi 0, %s196
    %s218 = sphi 0, %s220
    %s221 = sphi 0, %s218
    %s222 = sphi 0, %s221
    %s238 = sphi 0, %s222
  $region4: #{dtls_forward.1} parent=0 // loop_header_branch
    %18 = sbr.rel (%p16) target = $region8
  $region5: #{dtls_forward.1} parent=0 // loop_body
    %s20 = ssub.s32 %s15, 1
    %s21 = ssub.s32 %s15, 2
    %s22 = sadd.s32 %s15, 1
    %s23 = ssub.s32 %s15, %s22
    %p24 = scmp.eq.s32.totalorder %s23, 0
    %s26 = sadd.s32 %s25, 1
    %s27 = scalar_select %p24, %s25, %s26
    %p30 = pneg %p24
    %p31 = scmp.eq.s32.totalorder %s15, 1
    %p32 = por %p30, %p31
    %p33 = scmp.ne.s32.totalorder %s25, %s28
    %p34 = scmp.eq.s32.totalorder %s15, 0
    %p35 = por %p33, %p34
    %p36 = scmp.ne.s32.totalorder %s25, %s28
    %p37 = scmp.eq.s32.totalorder %s20, 1
    %p38 = por %p36, %p37
    %p39 = scmp.ne.s32.totalorder %s28, %s29
    %p40 = scmp.eq.s32.totalorder %s20, 0
    %p41 = por %p39, %p40
    %p42 = scmp.ne.s32.totalorder %s28, %s29
    %p43 = scmp.eq.s32.totalorder %s21, 1
    %p44 = por %p42, %p43
    %p46 = scmp.ne.s32.totalorder %s29, %s45
    %p47 = scmp.eq.s32.totalorder %s21, 0
    %p48 = por %p46, %p47
    %s49 = ssub.s32 %s15, %s22
    %p50 = scmp.eq.s32.totalorder %s49, 0
    %s52 = sadd.s32 %s51, 1
    %s53 = scalar_select %p50, %s51, %s52
    %p56 = pneg %p50
    %p57 = scmp.eq.s32.totalorder %s15, 1
    %p58 = por %p56, %p57
    %p59 = scmp.ne.s32.totalorder %s51, %s54
    %p60 = scmp.eq.s32.totalorder %s15, 0
    %p61 = por %p59, %p60
    %p62 = scmp.ne.s32.totalorder %s51, %s54
    %p63 = scmp.eq.s32.totalorder %s20, 1
    %p64 = por %p62, %p63
    %p65 = scmp.ne.s32.totalorder %s54, %s55
    %p66 = scmp.eq.s32.totalorder %s20, 0
    %p67 = por %p65, %p66
    %p68 = scmp.ne.s32.totalorder %s54, %s55
    %p69 = scmp.eq.s32.totalorder %s21, 1
    %p70 = por %p68, %p69
    %p72 = scmp.ne.s32.totalorder %s55, %s71
    %p73 = scmp.eq.s32.totalorder %s21, 0
    %p74 = por %p72, %p73
    %s75 = ssub.s32 %s15, %s22
    %p76 = scmp.eq.s32.totalorder %s75, 0
    %s78 = sadd.s32 %s77, 1
    %s79 = scalar_select %p76, %s77, %s78
    %p82 = pneg %p76
    %p83 = scmp.eq.s32.totalorder %s15, 1
    %p84 = por %p82, %p83
    %p85 = scmp.ne.s32.totalorder %s77, %s80
    %p86 = scmp.eq.s32.totalorder %s15, 0
    %p87 = por %p85, %p86
    %p88 = scmp.ne.s32.totalorder %s77, %s80
    %p89 = scmp.eq.s32.totalorder %s20, 1
    %p90 = por %p88, %p89
    %p91 = scmp.ne.s32.totalorder %s80, %s81
    %p92 = scmp.eq.s32.totalorder %s20, 0
    %p93 = por %p91, %p92
    %p94 = scmp.ne.s32.totalorder %s80, %s81
    %p95 = scmp.eq.s32.totalorder %s21, 1
    %p96 = por %p94, %p95
    %p98 = scmp.ne.s32.totalorder %s81, %s97
    %p99 = scmp.eq.s32.totalorder %s21, 0
    %p100 = por %p98, %p99
    %s101 = ssub.s32 %s15, %s22
    %p102 = scmp.eq.s32.totalorder %s101, 0
    %s104 = sadd.s32 %s103, 1
    %s105 = scalar_select %p102, %s103, %s104
    %p108 = pneg %p102
    %p109 = scmp.eq.s32.totalorder %s15, 1
    %p110 = por %p108, %p109
    %p111 = scmp.ne.s32.totalorder %s103, %s106
    %p112 = scmp.eq.s32.totalorder %s15, 0
    %p113 = por %p111, %p112
    %p114 = scmp.ne.s32.totalorder %s103, %s106
    %p115 = scmp.eq.s32.totalorder %s20, 1
    %p116 = por %p114, %p115
    %p117 = scmp.ne.s32.totalorder %s106, %s107
    %p118 = scmp.eq.s32.totalorder %s20, 0
    %p119 = por %p117, %p118
    %p120 = scmp.ne.s32.totalorder %s106, %s107
    %p121 = scmp.eq.s32.totalorder %s21, 1
    %p122 = por %p120, %p121
    %p124 = scmp.ne.s32.totalorder %s107, %s123
    %p125 = scmp.eq.s32.totalorder %s21, 0
    %p126 = por %p124, %p125
    %s128 = sadd.s32 %s127, 1
    %p131 = scmp.eq.s32.totalorder %s15, 1
    %p132 = scmp.ne.s32.totalorder %s127, %s129
    %p133 = scmp.eq.s32.totalorder %s15, 0
    %p134 = por %p132, %p133
    %p135 = scmp.ne.s32.totalorder %s127, %s129
    %p136 = scmp.eq.s32.totalorder %s20, 1
    %p137 = por %p135, %p136
    %p138 = scmp.ne.s32.totalorder %s129, %s130
    %p139 = scmp.eq.s32.totalorder %s20, 0
    %p140 = por %p138, %p139
    %p141 = scmp.ne.s32.totalorder %s129, %s130
    %p142 = scmp.eq.s32.totalorder %s21, 1
    %p143 = por %p141, %p142
    %p145 = scmp.ne.s32.totalorder %s130, %s144
    %p146 = scmp.eq.s32.totalorder %s21, 0
    %p147 = por %p145, %p146
    %s149 = sadd.s32 %s148, 1
    %p152 = scmp.eq.s32.totalorder %s15, 1
    %p153 = scmp.ne.s32.totalorder %s148, %s150
    %p154 = scmp.eq.s32.totalorder %s15, 0
    %p155 = por %p153, %p154
    %p156 = scmp.ne.s32.totalorder %s148, %s150
    %p157 = scmp.eq.s32.totalorder %s20, 1
    %p158 = por %p156, %p157
    %p159 = scmp.ne.s32.totalorder %s150, %s151
    %p160 = scmp.eq.s32.totalorder %s20, 0
    %p161 = por %p159, %p160
    %p162 = scmp.ne.s32.totalorder %s150, %s151
    %p163 = scmp.eq.s32.totalorder %s21, 1
    %p164 = por %p162, %p163
    %p166 = scmp.ne.s32.totalorder %s151, %s165
    %p167 = scmp.eq.s32.totalorder %s21, 0
    %p168 = por %p166, %p167
    %s170 = sadd.s32 %s169, 1
    %p173 = scmp.eq.s32.totalorder %s15, 1
    %p174 = scmp.ne.s32.totalorder %s169, %s171
    %p175 = scmp.eq.s32.totalorder %s15, 0
    %p176 = por %p174, %p175
    %p177 = scmp.ne.s32.totalorder %s169, %s171
    %p178 = scmp.eq.s32.totalorder %s20, 1
    %p179 = por %p177, %p178
    %p180 = scmp.ne.s32.totalorder %s171, %s172
    %p181 = scmp.eq.s32.totalorder %s20, 0
    %p182 = por %p180, %p181
    %p183 = scmp.ne.s32.totalorder %s171, %s172
    %p184 = scmp.eq.s32.totalorder %s21, 1
    %p185 = por %p183, %p184
    %p187 = scmp.ne.s32.totalorder %s172, %s186
    %p188 = scmp.eq.s32.totalorder %s21, 0
    %p189 = por %p187, %p188
    %s190 = ssub.s32 %s15, %s22
    %p191 = scmp.eq.s32.totalorder %s190, 0
    %s193 = sadd.s32 %s192, 1
    %s194 = scalar_select %p191, %s192, %s193
    %p197 = pneg %p191
    %p198 = scmp.eq.s32.totalorder %s15, 1
    %p199 = por %p197, %p198
    %p200 = scmp.ne.s32.totalorder %s192, %s195
    %p201 = scmp.eq.s32.totalorder %s15, 0
    %p202 = por %p200, %p201
    %p203 = scmp.ne.s32.totalorder %s192, %s195
    %p204 = scmp.eq.s32.totalorder %s20, 1
    %p205 = por %p203, %p204
    %p206 = scmp.ne.s32.totalorder %s195, %s196
    %p207 = scmp.eq.s32.totalorder %s20, 0
    %p208 = por %p206, %p207
    %p209 = scmp.ne.s32.totalorder %s195, %s196
    %p210 = scmp.eq.s32.totalorder %s21, 1
    %p211 = por %p209, %p210
    %p213 = scmp.ne.s32.totalorder %s196, %s212
    %p214 = scmp.eq.s32.totalorder %s21, 0
    %p215 = por %p213, %p214
    %s216 = ssub.s32 %s15, %s22
    %p217 = scmp.eq.s32.totalorder %s216, 0
    %s219 = sadd.s32 %s218, 1
    %s220 = scalar_select %p217, %s218, %s219
    %p223 = pneg %p217
    %p224 = scmp.eq.s32.totalorder %s15, 1
    %p225 = por %p223, %p224
    %p226 = scmp.ne.s32.totalorder %s218, %s221
    %p227 = scmp.eq.s32.totalorder %s15, 0
    %p228 = por %p226, %p227
    %p229 = scmp.ne.s32.totalorder %s218, %s221
    %p230 = scmp.eq.s32.totalorder %s20, 1
    %p231 = por %p229, %p230
    %p232 = scmp.ne.s32.totalorder %s221, %s222
    %p233 = scmp.eq.s32.totalorder %s20, 0
    %p234 = por %p232, %p233
    %p235 = scmp.ne.s32.totalorder %s221, %s222
    %p236 = scmp.eq.s32.totalorder %s21, 1
    %p237 = por %p235, %p236
    %p239 = scmp.ne.s32.totalorder %s222, %s238
    %p240 = scmp.eq.s32.totalorder %s21, 0
    %p241 = por %p239, %p240
    %p242 = scmp.le.s32.totalorder 1, %s15
    %p243 = scmp.lt.s32.totalorder %s15, 3
    %p244 = pnand %p242, %p243
    %p245 = pneg %p244
    // Predicated region
    $region9: #{dtls_forward.1} parent=5 // pred_check
      _
    $region10: #{dtls_forward.1} parent=5 // pred_check_branch
      %247 = sbr.rel (%p244) target = $region12
    $region11: #{dtls_forward.1} parent=5 // pred_region
      %s248 = ssub.s32 %s15, 1
      // Predicated region
      $region13: #{dtls_forward.1} parent=11 // pred_check
        %p249 = pneg %p140
      $region14: #{dtls_forward.1} parent=11 // pred_check_branch
        %251 = sbr.rel (%p249) target = $region16
      $region15: #{dtls_forward.1} parent=11 // pred_region
        _
      $region16: #{dtls_forward.1} parent=11 // pred_fallthru
        _
      // Predicated region
      $region17: #{dtls_forward.1} parent=11 // pred_check
        %p252 = pneg %p161
      $region18: #{dtls_forward.1} parent=11 // pred_check_branch
        %254 = sbr.rel (%p252) target = $region20
      $region19: #{dtls_forward.1} parent=11 // pred_region
        _
      $region20: #{dtls_forward.1} parent=11 // pred_fallthru
        _
      // Predicated region
      $region21: #{dtls_forward.1} parent=11 // pred_check
        %p255 = pneg %p182
      $region22: #{dtls_forward.1} parent=11 // pred_check_branch
        %257 = sbr.rel (%p255) target = $region24
      $region23: #{dtls_forward.1} parent=11 // pred_region
        _
      $region24: #{dtls_forward.1} parent=11 // pred_fallthru
        _
    $region12: #{dtls_forward.1} parent=5 // pred_fallthru
      _
    %p258 = scmp.lt.s32.totalorder %s15, 2
    // Predicated region
    $region25: #{dtls_forward.1} parent=5 // pred_check
      %p259 = pneg %p258
    $region26: #{dtls_forward.1} parent=5 // pred_check_branch
      %261 = sbr.rel (%p259) target = $region28
    $region27: #{dtls_forward.1} parent=5 // pred_region
      // Predicated region
      $region29: #{dtls_forward.1} parent=27 // pred_check
        %p262 = pneg %p35
      $region30: #{dtls_forward.1} parent=27 // pred_check_branch
        %264 = sbr.rel (%p262) target = $region32
      $region31: #{dtls_forward.1} parent=27 // pred_region
        %p265 = scmp.lt.s32.totalorder %s15, 1
        %s266 = scalar_select %p265, %s15, 1
        %s267 = smul.addr %s266, 8
        %s268 = smul.addr %s267, 8
        %s269 = scalar_lea.vmem %s0, %s268
      $region32: #{dtls_forward.1} parent=27 // pred_fallthru
        _
      // Predicated region
      $region33: #{dtls_forward.1} parent=27 // pred_check
        %p270 = pneg %p61
      $region34: #{dtls_forward.1} parent=27 // pred_check_branch
        %272 = sbr.rel (%p270) target = $region36
      $region35: #{dtls_forward.1} parent=27 // pred_region
        %p273 = scmp.lt.s32.totalorder %s15, 1
        %s274 = scalar_select %p273, %s15, 1
        %s275 = smul.addr %s274, 2
        %s276 = smul.addr %s275, 4
        %s277 = scalar_lea.vmem %s1, %s276
      $region36: #{dtls_forward.1} parent=27 // pred_fallthru
        _
      // Predicated region
      $region37: #{dtls_forward.1} parent=27 // pred_check
        %p278 = pneg %p87
      $region38: #{dtls_forward.1} parent=27 // pred_check_branch
        %280 = sbr.rel (%p278) target = $region40
      $region39: #{dtls_forward.1} parent=27 // pred_region
        %p281 = scmp.lt.s32.totalorder %s15, 1
        %s282 = scalar_select %p281, %s15, 1
        %s283 = smul.addr %s282, 2
        %s284 = smul.addr %s283, 4
        %s285 = scalar_lea.vmem %s2, %s284
      $region40: #{dtls_forward.1} parent=27 // pred_fallthru
        _
      // Predicated region
      $region41: #{dtls_forward.1} parent=27 // pred_check
        %p286 = pneg %p113
      $region42: #{dtls_forward.1} parent=27 // pred_check_branch
        %288 = sbr.rel (%p286) target = $region44
      $region43: #{dtls_forward.1} parent=27 // pred_region
        %p289 = scmp.lt.s32.totalorder %s15, 1
        %s290 = scalar_select %p289, %s15, 1
        %s291 = scalar_lea.vmem %s3, %s290
      $region44: #{dtls_forward.1} parent=27 // pred_fallthru
        _
    $region28: #{dtls_forward.1} parent=5 // pred_fallthru
      _
    %p292 = scmp.le.s32.totalorder 1, %s15
    %p293 = scmp.lt.s32.totalorder %s15, 3
    %p294 = pnand %p292, %p293
    %p295 = pneg %p294
    // Predicated region
    $region45: #{dtls_forward.1} parent=5 // pred_check
      _
    $region46: #{dtls_forward.1} parent=5 // pred_check_branch
      %297 = sbr.rel (%p294) target = $region48
    $region47: #{dtls_forward.1} parent=5 // pred_region
      %s298 = ssub.s32 %s15, 1
      %p299 = scmp.lt.s32.totalorder %s20, 1
      %s300 = scalar_select %p299, %s20, 1
      %s301 = smul.addr %s300, 8
      %s302 = smul.addr %s301, 8
      %s303 = scalar_lea.vmem %s0, %s302
      %p304 = pneg %p41
      %p305 = pneg %p38
      %p306 = scmp.lt.s32.totalorder %s20, 1
      %s307 = scalar_select %p306, %s20, 1
      %s308 = smul.addr %s307, 2
      %s309 = smul.addr %s308, 4
      %s310 = scalar_lea.vmem %s1, %s309
      %p311 = pneg %p67
      %p312 = pneg %p64
      %p313 = scmp.lt.s32.totalorder %s20, 1
      %s314 = scalar_select %p313, %s20, 1
      %s315 = smul.addr %s314, 2
      %s316 = smul.addr %s315, 4
      %s317 = scalar_lea.vmem %s2, %s316
      %p318 = pneg %p93
      %p319 = pneg %p90
      %p320 = scmp.lt.s32.totalorder %s20, 1
      %s321 = scalar_select %p320, %s20, 1
      %s322 = scalar_lea.vmem %s3, %s321
      %p323 = pneg %p119
      %p324 = pneg %p116
      %p325 = pneg %p140
      %p326 = pneg %p137
      %p327 = pneg %p161
      %p328 = pneg %p158
      %p329 = pneg %p182
      %p330 = pneg %p179
      %p331 = pneg %p208
      %p332 = pneg %p205
      %p333 = scmp.lt.s32.totalorder %s20, 1
      %s334 = scalar_select %p333, %s20, 1
      %s335 = smul.addr %s334, 8
      %s336 = smul.addr %s335, 4
      %s337 = scalar_lea.vmem %s7, %s336
      %p338 = pneg %p234
      %p339 = pneg %p231
      %p340 = scmp.lt.s32.totalorder %s20, 1
      %s341 = scalar_select %p340, %s20, 1
      %s342 = scalar_lea.vmem %s8, %s341
      %p343 = scmp.lt.s32.totalorder %s20, 1
      %s344 = scalar_select %p343, %s20, 1
      %s345 = smul.addr %s344, 8
      %s346 = smul.addr %s345, 8
      %s347 = scalar_lea.vmem %s0, %s346
      %p348 = scmp.lt.s32.totalorder %s20, 1
      %s349 = scalar_select %p348, %s20, 1
      %s350 = smul.addr %s349, 2
      %s351 = smul.addr %s350, 4
      %s352 = scalar_lea.vmem %s1, %s351
      %p353 = scmp.lt.s32.totalorder %s20, 1
      %s354 = scalar_select %p353, %s20, 1
      %s355 = smul.addr %s354, 2
      %s356 = smul.addr %s355, 4
      %s357 = scalar_lea.vmem %s2, %s356
      %p358 = scmp.lt.s32.totalorder %s20, 1
      %s359 = scalar_select %p358, %s20, 1
      %s360 = scalar_lea.vmem %s3, %s359
      %p361 = scmp.lt.s32.totalorder %s20, 1
      %s362 = scalar_select %p361, %s20, 1
      %s363 = smul.addr %s362, 8
      %s364 = smul.addr %s363, 4
      %s365 = scalar_lea.vmem %s7, %s364
      %p366 = scmp.lt.s32.totalorder %s20, 1
      %s367 = scalar_select %p366, %s20, 1
      %s368 = scalar_lea.vmem %s8, %s367
      %v370 = vld [vmem:[%s347] sm:$0xff]
      %v371 = vld [vmem:[%s347 + $0x8] sm:$0xff]
      %v372 = vld [vmem:[%s347 + $0x10] sm:$0xff]
      %v373 = vld [vmem:[%s347 + $0x18] sm:$0xff]
      %v374 = vld [vmem:[%s347 + $0x20] sm:$0xff]
      %v375 = vld [vmem:[%s347 + $0x28] sm:$0xff]
      %v376 = vld [vmem:[%s347 + $0x30] sm:$0xff]
      %v377 = vld [vmem:[%s347 + $0x38] sm:$0xff]
      %v378 = vpack.c.bf16 %v371, %v370
      %v379 = vpack.c.bf16 %v373, %v372
      %v380 = vpack.c.bf16 %v375, %v374
      %v381 = vpack.c.bf16 %v377, %v376
      %v382 = vld [vmem:[%s352] sm:$0xf]
      %v383 = vld [vmem:[%s352 + $0x4] sm:$0xf]
      %v384 = vld [vmem:[%s357] sm:$0xf]
      %v385 = vld [vmem:[%s357 + $0x4] sm:$0xf]
      %v388 = vunpack.c.l.b16 %v384
      %v389 = vunpack.c.l.b16 %v385
      %v390 = vpack.c.b16 %v389, %v388
      %vm392 = vcmask 130048
      %v394 = vsel %vm392, %v378, 0
      %v397 = vsel %vm392, %v379, 0
      %v400 = vsel %vm392, %v380, 0
      %v403 = vsel %vm392, %v381, 0
      %405 = vmatprep.subr.bf16.mxu0 0
      %406 = vmatpush1.bf16.msra.mxu0 0
      %407 = vmatprep.subr.bf16.mxu0 0
      %408 = vmatpush1.bf16.msra.mxu0 0
      %409 = vmatprep.subr.bf16.mxu0 0
      %410 = vmatpush1.bf16.msra.mxu0 0
      %411 = vmatprep.subr.bf16.mxu0 0
      %412 = vmatpush1.bf16.msra.mxu0 0
      %413 = vmatprep.subr.bf16.mxu0 0
      %414 = vmatpush1.bf16.msra.mxu0 0
      %415 = vmatprep.subr.bf16.mxu0 0
      %416 = vmatpush1.bf16.msra.mxu0 0
      %417 = vmatprep.subr.bf16.mxu0 0
      %418 = vmatpush1.bf16.msra.mxu0 0
      %419 = vmatprep.subr.bf16.mxu0 0
      %420 = vmatpush1.bf16.msra.mxu0 %v390
      %421 = vmatprep.subr.bf16.mxu0 0
      %422 = vmatpush2.bf16.msra.mxu0 0
      %423 = vmatprep.subr.bf16.mxu0 0
      %424 = vmatpush2.bf16.msra.mxu0 0
      %425 = vmatprep.subr.bf16.mxu0 0
      %426 = vmatpush2.bf16.msra.mxu0 0
      %427 = vmatprep.subr.bf16.mxu0 0
      %428 = vmatpush2.bf16.msra.mxu0 0
      %429 = vmatprep.subr.bf16.mxu0 0
      %430 = vmatpush2.bf16.msra.mxu0 0
      %431 = vmatprep.subr.bf16.mxu0 0
      %432 = vmatpush2.bf16.msra.mxu0 0
      %433 = vmatprep.subr.bf16.mxu0 0
      %434 = vmatpush2.bf16.msra.mxu0 0
      %435 = vmatprep.subr.bf16.mxu0 0
      %436 = vmatpush2.bf16.msra.mxu0 0
      %437 = vmatprep.mubr.bf16.mxu0 0
      %438 = vmatmul.mubr.bf16.gmra.mxu0 %v394
      %v439 = vpop.f32.mrf.mxu0
      %v440 = vadd.f32 0.0, %v439
      %v441 = vpop.f32.mrf.mxu0
      %v442 = vpop.f32.mrf.mxu0
      %v443 = vadd.f32 0.0, %v442
      %v444 = vpop.f32.mrf.mxu0
      %445 = vmatprep.mubr.bf16.mxu0 0
      %446 = vmatmul.mubr.bf16.gmra.mxu0 %v397
      %v447 = vpop.f32.mrf.mxu0
      %v448 = vadd.f32 0.0, %v447
      %v449 = vpop.f32.mrf.mxu0
      %v450 = vpop.f32.mrf.mxu0
      %v451 = vadd.f32 0.0, %v450
      %v452 = vpop.f32.mrf.mxu0
      %453 = vmatprep.mubr.bf16.mxu0 0
      %454 = vmatmul.mubr.bf16.gmra.mxu0 %v400
      %v455 = vpop.f32.mrf.mxu0
      %v456 = vadd.f32 0.0, %v455
      %v457 = vpop.f32.mrf.mxu0
      %v458 = vpop.f32.mrf.mxu0
      %v459 = vadd.f32 0.0, %v458
      %v460 = vpop.f32.mrf.mxu0
      %461 = vmatprep.mubr.bf16.mxu0 0
      %462 = vmatmul.mubr.bf16.gmra.mxu0 %v403
      %v463 = vpop.f32.mrf.mxu0
      %v464 = vadd.f32 0.0, %v463
      %v465 = vpop.f32.mrf.mxu0
      %v466 = vpop.f32.mrf.mxu0
      %v467 = vadd.f32 0.0, %v466
      %v468 = vpop.f32.mrf.mxu0
      %469 = vdwg.mxu0
      %v470 = vpack.c.bf16 %v443, %v440
      %v473 = vunpack.c.l.b16 %v382
      %v474 = vunpack.c.l.b16 %v383
      %v475 = vpack.c.b16 %v474, %v473
      %v477 = vsel %vm392, %v475, 0
      %479 = vmatprep.subr.bf16.mxu0 0
      %480 = vmatpush1.bf16.msra.mxu0 0
      %481 = vmatprep.subr.bf16.mxu0 0
      %482 = vmatpush1.bf16.msra.mxu0 0
      %483 = vmatprep.subr.bf16.mxu0 0
      %484 = vmatpush1.bf16.msra.mxu0 0
      %485 = vmatprep.subr.bf16.mxu0 0
      %486 = vmatpush1.bf16.msra.mxu0 0
      %487 = vmatprep.subr.bf16.mxu0 0
      %488 = vmatpush1.bf16.msra.mxu0 0
      %489 = vmatprep.subr.bf16.mxu0 0
      %490 = vmatpush1.bf16.msra.mxu0 0
      %491 = vmatprep.subr.bf16.mxu0 0
      %492 = vmatpush1.bf16.msra.mxu0 0
      %493 = vmatprep.subr.bf16.mxu0 0
      %494 = vmatpush1.bf16.msra.mxu0 %v470
      %495 = vmatprep.subr.bf16.mxu0 0
      %496 = vmatpush2.bf16.msra.mxu0 0
      %497 = vmatprep.subr.bf16.mxu0 0
      %498 = vmatpush2.bf16.msra.mxu0 0
      %499 = vmatprep.subr.bf16.mxu0 0
      %500 = vmatpush2.bf16.msra.mxu0 0
      %501 = vmatprep.subr.bf16.mxu0 0
      %502 = vmatpush2.bf16.msra.mxu0 0
      %503 = vmatprep.subr.bf16.mxu0 0
      %504 = vmatpush2.bf16.msra.mxu0 0
      %505 = vmatprep.subr.bf16.mxu0 0
      %506 = vmatpush2.bf16.msra.mxu0 0
      %507 = vmatprep.subr.bf16.mxu0 0
      %508 = vmatpush2.bf16.msra.mxu0 0
      %509 = vmatprep.subr.bf16.mxu0 0
      %510 = vmatpush2.bf16.msra.mxu0 0
      %511 = vmatprep.mubr.bf16.mxu0 0
      %512 = vmatmul.mubr.bf16.gmra.mxu0 %v477
      %v513 = vpop.f32.mrf.mxu0
      %v514 = vadd.f32 0.0, %v513
      %v515 = vpop.f32.mrf.mxu0
      %v516 = vpop.f32.mrf.mxu0
      %v517 = vadd.f32 0.0, %v516
      %v518 = vpop.f32.mrf.mxu0
      %519 = vdwg.mxu0
      %v520 = vpack.c.bf16 %v451, %v448
      %521 = vmatprep.subr.bf16.mxu0 0
      %522 = vmatpush1.bf16.msra.mxu0 0
      %523 = vmatprep.subr.bf16.mxu0 0
      %524 = vmatpush1.bf16.msra.mxu0 0
      %525 = vmatprep.subr.bf16.mxu0 0
      %526 = vmatpush1.bf16.msra.mxu0 0
      %527 = vmatprep.subr.bf16.mxu0 0
      %528 = vmatpush1.bf16.msra.mxu0 0
      %529 = vmatprep.subr.bf16.mxu0 0
      %530 = vmatpush1.bf16.msra.mxu0 0
      %531 = vmatprep.subr.bf16.mxu0 0
      %532 = vmatpush1.bf16.msra.mxu0 0
      %533 = vmatprep.subr.bf16.mxu0 0
      %534 = vmatpush1.bf16.msra.mxu0 0
      %535 = vmatprep.subr.bf16.mxu0 0
      %536 = vmatpush1.bf16.msra.mxu0 %v520
      %537 = vmatprep.subr.bf16.mxu0 0
      %538 = vmatpush2.bf16.msra.mxu0 0
      %539 = vmatprep.subr.bf16.mxu0 0
      %540 = vmatpush2.bf16.msra.mxu0 0
      %541 = vmatprep.subr.bf16.mxu0 0
      %542 = vmatpush2.bf16.msra.mxu0 0
      %543 = vmatprep.subr.bf16.mxu0 0
      %544 = vmatpush2.bf16.msra.mxu0 0
      %545 = vmatprep.subr.bf16.mxu0 0
      %546 = vmatpush2.bf16.msra.mxu0 0
      %547 = vmatprep.subr.bf16.mxu0 0
      %548 = vmatpush2.bf16.msra.mxu0 0
      %549 = vmatprep.subr.bf16.mxu0 0
      %550 = vmatpush2.bf16.msra.mxu0 0
      %551 = vmatprep.subr.bf16.mxu0 0
      %552 = vmatpush2.bf16.msra.mxu0 0
      %553 = vmatprep.mubr.bf16.mxu0 0
      %554 = vmatmul.mubr.bf16.gmra.mxu0 %v477
      %v555 = vpop.f32.mrf.mxu0
      %v556 = vadd.f32 0.0, %v555
      %v557 = vpop.f32.mrf.mxu0
      %v558 = vpop.f32.mrf.mxu0
      %v559 = vadd.f32 0.0, %v558
      %v560 = vpop.f32.mrf.mxu0
      %561 = vdwg.mxu0
      %v562 = vpack.c.bf16 %v459, %v456
      %563 = vmatprep.subr.bf16.mxu0 0
      %564 = vmatpush1.bf16.msra.mxu0 0
      %565 = vmatprep.subr.bf16.mxu0 0
      %566 = vmatpush1.bf16.msra.mxu0 0
      %567 = vmatprep.subr.bf16.mxu0 0
      %568 = vmatpush1.bf16.msra.mxu0 0
      %569 = vmatprep.subr.bf16.mxu0 0
      %570 = vmatpush1.bf16.msra.mxu0 0
      %571 = vmatprep.subr.bf16.mxu0 0
      %572 = vmatpush1.bf16.msra.mxu0 0
      %573 = vmatprep.subr.bf16.mxu0 0
      %574 = vmatpush1.bf16.msra.mxu0 0
      %575 = vmatprep.subr.bf16.mxu0 0
      %576 = vmatpush1.bf16.msra.mxu0 0
      %577 = vmatprep.subr.bf16.mxu0 0
      %578 = vmatpush1.bf16.msra.mxu0 %v562
      %579 = vmatprep.subr.bf16.mxu0 0
      %580 = vmatpush2.bf16.msra.mxu0 0
      %581 = vmatprep.subr.bf16.mxu0 0
      %582 = vmatpush2.bf16.msra.mxu0 0
      %583 = vmatprep.subr.bf16.mxu0 0
      %584 = vmatpush2.bf16.msra.mxu0 0
      %585 = vmatprep.subr.bf16.mxu0 0
      %586 = vmatpush2.bf16.msra.mxu0 0
      %587 = vmatprep.subr.bf16.mxu0 0
      %588 = vmatpush2.bf16.msra.mxu0 0
      %589 = vmatprep.subr.bf16.mxu0 0
      %590 = vmatpush2.bf16.msra.mxu0 0
      %591 = vmatprep.subr.bf16.mxu0 0
      %592 = vmatpush2.bf16.msra.mxu0 0
      %593 = vmatprep.subr.bf16.mxu0 0
      %594 = vmatpush2.bf16.msra.mxu0 0
      %595 = vmatprep.mubr.bf16.mxu0 0
      %596 = vmatmul.mubr.bf16.gmra.mxu0 %v477
      %v597 = vpop.f32.mrf.mxu0
      %v598 = vadd.f32 0.0, %v597
      %v599 = vpop.f32.mrf.mxu0
      %v600 = vpop.f32.mrf.mxu0
      %v601 = vadd.f32 0.0, %v600
      %v602 = vpop.f32.mrf.mxu0
      %603 = vdwg.mxu0
      %v604 = vpack.c.bf16 %v467, %v464
      %605 = vmatprep.subr.bf16.mxu0 0
      %606 = vmatpush1.bf16.msra.mxu0 0
      %607 = vmatprep.subr.bf16.mxu0 0
      %608 = vmatpush1.bf16.msra.mxu0 0
      %609 = vmatprep.subr.bf16.mxu0 0
      %610 = vmatpush1.bf16.msra.mxu0 0
      %611 = vmatprep.subr.bf16.mxu0 0
      %612 = vmatpush1.bf16.msra.mxu0 0
      %613 = vmatprep.subr.bf16.mxu0 0
      %614 = vmatpush1.bf16.msra.mxu0 0
      %615 = vmatprep.subr.bf16.mxu0 0
      %616 = vmatpush1.bf16.msra.mxu0 0
      %617 = vmatprep.subr.bf16.mxu0 0
      %618 = vmatpush1.bf16.msra.mxu0 0
      %619 = vmatprep.subr.bf16.mxu0 0
      %620 = vmatpush1.bf16.msra.mxu0 %v604
      %621 = vmatprep.subr.bf16.mxu0 0
      %622 = vmatpush2.bf16.msra.mxu0 0
      %623 = vmatprep.subr.bf16.mxu0 0
      %624 = vmatpush2.bf16.msra.mxu0 0
      %625 = vmatprep.subr.bf16.mxu0 0
      %626 = vmatpush2.bf16.msra.mxu0 0
      %627 = vmatprep.subr.bf16.mxu0 0
      %628 = vmatpush2.bf16.msra.mxu0 0
      %629 = vmatprep.subr.bf16.mxu0 0
      %630 = vmatpush2.bf16.msra.mxu0 0
      %631 = vmatprep.subr.bf16.mxu0 0
      %632 = vmatpush2.bf16.msra.mxu0 0
      %633 = vmatprep.subr.bf16.mxu0 0
      %634 = vmatpush2.bf16.msra.mxu0 0
      %635 = vmatprep.subr.bf16.mxu0 0
      %636 = vmatpush2.bf16.msra.mxu0 0
      %637 = vmatprep.mubr.bf16.mxu0 0
      %638 = vmatmul.mubr.bf16.gmra.mxu0 %v477
      %v639 = vpop.f32.mrf.mxu0
      %v640 = vadd.f32 0.0, %v639
      %v641 = vpop.f32.mrf.mxu0
      %v642 = vpop.f32.mrf.mxu0
      %v643 = vadd.f32 0.0, %v642
      %v644 = vpop.f32.mrf.mxu0
      %645 = vdwg.mxu0
      %v646 = vld [vmem:[%s4] sm:$0x1]
      %v648 = vlaneseq
      %v649 = vshrl.u32 %v648, 7
      %v650 = vsub.s32 0, %v649
      %v651 = vrot.slane %v646, %v650
      %v653 = vadd.f32 %v514, %v651
      %v654 = vadd.f32 %v517, %v651
      %v655 = vadd.f32 %v556, %v651
      %v656 = vadd.f32 %v559, %v651
      %v657 = vadd.f32 %v598, %v651
      %v658 = vadd.f32 %v601, %v651
      %v659 = vadd.f32 %v640, %v651
      %v660 = vadd.f32 %v643, %v651
      %v661 = vld [vmem:[%s360] sm:$0x1]
      %v663 = vlaneseq
      %v664 = vshrl.u32 %v663, 7
      %v665 = vsub.s32 0, %v664
      %v666 = vrot.slane %v661, %v665
      %v668 = vadd.f32 %v653, %v666
      %v669 = vadd.f32 %v654, %v666
      %v670 = vadd.f32 %v655, %v666
      %v671 = vadd.f32 %v656, %v666
      %v672 = vadd.f32 %v657, %v666
      %v673 = vadd.f32 %v658, %v666
      %v674 = vadd.f32 %v659, %v666
      %v675 = vadd.f32 %v660, %v666
      %v676 = vmax.f32 %v668, 0.0
      %v677 = vmax.f32 %v669, 0.0
      %v678 = vmax.f32 %v670, 0.0
      %v679 = vmax.f32 %v671, 0.0
      %v680 = vmax.f32 %v672, 0.0
      %v681 = vmax.f32 %v673, 0.0
      %v682 = vmax.f32 %v674, 0.0
      %v683 = vmax.f32 %v675, 0.0
      %v684 = vpack.c.bf16 %v677, %v676
      %v685 = vpack.c.bf16 %v679, %v678
      %v686 = vpack.c.bf16 %v681, %v680
      %v687 = vpack.c.bf16 %v683, %v682
      %v688 = vld [vmem:[%s5] sm:$0xf]
      %v689 = vld [vmem:[%s5 + $0x4] sm:$0xf]
      %v690 = vld [vmem:[%s5 + $0x8] sm:$0xf]
      %v691 = vld [vmem:[%s5 + $0xc] sm:$0xf]
      %v692 = vld [vmem:[%s6] sm:$0x1]
      %v694 = vlaneseq
      %v695 = vshrl.u32 %v694, 7
      %v696 = vsub.s32 0, %v695
      %v697 = vrot.slane %v692, %v696
      %v703 = vunpack.c.l.b16 %v688
      %v704 = vunpack.c.l.b16 %v689
      %v705 = vunpack.c.l.b16 %v690
      %v706 = vunpack.c.l.b16 %v691
      %v707 = vpack.c.b16 %v704, %v703
      %v708 = vpack.c.b16 %v706, %v705
      %vm711 = vcmask 261120
      %v713 = vsel %vm711, %v684, 0
      %v716 = vsel %vm711, %v685, 0
      %v719 = vsel %vm711, %v686, 0
      %v722 = vsel %vm711, %v687, 0
      %724 = vmatprep.subr.bf16.mxu0 0
      %725 = vmatpush1.bf16.msra.mxu0 0
      %726 = vmatprep.subr.bf16.mxu0 0
      %727 = vmatpush1.bf16.msra.mxu0 0
      %728 = vmatprep.subr.bf16.mxu0 0
      %729 = vmatpush1.bf16.msra.mxu0 0
      %730 = vmatprep.subr.bf16.mxu0 0
      %731 = vmatpush1.bf16.msra.mxu0 0
      %732 = vmatprep.subr.bf16.mxu0 0
      %733 = vmatpush1.bf16.msra.mxu0 0
      %734 = vmatprep.subr.bf16.mxu0 0
      %735 = vmatpush1.bf16.msra.mxu0 0
      %736 = vmatprep.subr.bf16.mxu0 0
      %737 = vmatpush1.bf16.msra.mxu0 %v708
      %738 = vmatprep.subr.bf16.mxu0 0
      %739 = vmatpush1.bf16.msra.mxu0 %v707
      %740 = vmatprep.subr.bf16.mxu0 0
      %741 = vmatpush2.bf16.msra.mxu0 0
      %742 = vmatprep.subr.bf16.mxu0 0
      %743 = vmatpush2.bf16.msra.mxu0 0
      %744 = vmatprep.subr.bf16.mxu0 0
      %745 = vmatpush2.bf16.msra.mxu0 0
      %746 = vmatprep.subr.bf16.mxu0 0
      %747 = vmatpush2.bf16.msra.mxu0 0
      %748 = vmatprep.subr.bf16.mxu0 0
      %749 = vmatpush2.bf16.msra.mxu0 0
      %750 = vmatprep.subr.bf16.mxu0 0
      %751 = vmatpush2.bf16.msra.mxu0 0
      %752 = vmatprep.subr.bf16.mxu0 0
      %753 = vmatpush2.bf16.msra.mxu0 0
      %754 = vmatprep.subr.bf16.mxu0 0
      %755 = vmatpush2.bf16.msra.mxu0 0
      %756 = vmatprep.mubr.bf16.mxu0 0
      %757 = vmatmul.mubr.bf16.gmra.mxu0 %v713
      %v758 = vpop.f32.mrf.mxu0
      %v759 = vadd.f32 %v697, %v758
      %v760 = vpop.f32.mrf.mxu0
      %v761 = vpop.f32.mrf.mxu0
      %v762 = vadd.f32 %v697, %v761
      %v763 = vpop.f32.mrf.mxu0
      %764 = vmatprep.mubr.bf16.mxu0 0
      %765 = vmatmul.mubr.bf16.gmra.mxu0 %v716
      %v766 = vpop.f32.mrf.mxu0
      %v767 = vadd.f32 %v697, %v766
      %v768 = vpop.f32.mrf.mxu0
      %v769 = vpop.f32.mrf.mxu0
      %v770 = vadd.f32 %v697, %v769
      %v771 = vpop.f32.mrf.mxu0
      %772 = vmatprep.mubr.bf16.mxu0 0
      %773 = vmatmul.mubr.bf16.gmra.mxu0 %v719
      %v774 = vpop.f32.mrf.mxu0
      %v775 = vadd.f32 %v697, %v774
      %v776 = vpop.f32.mrf.mxu0
      %v777 = vpop.f32.mrf.mxu0
      %v778 = vadd.f32 %v697, %v777
      %v779 = vpop.f32.mrf.mxu0
      %780 = vmatprep.mubr.bf16.mxu0 0
      %781 = vmatmul.mubr.bf16.gmra.mxu0 %v722
      %v782 = vpop.f32.mrf.mxu0
      %v783 = vadd.f32 %v697, %v782
      %v784 = vpop.f32.mrf.mxu0
      %v785 = vpop.f32.mrf.mxu0
      %v786 = vadd.f32 %v697, %v785
      %v787 = vpop.f32.mrf.mxu0
      %788 = vdwg.mxu0
      %v789 = vpack.c.bf16 %v762, %v759
      %v790 = vpack.c.bf16 %v770, %v767
      %v791 = vpack.c.bf16 %v778, %v775
      %v792 = vpack.c.bf16 %v786, %v783
      %v797 = vunpack.c.l.b16 %v789
      %v798 = vunpack.c.h.b16 %v789
      %v799 = vunpack.c.l.b16 %v790
      %v800 = vunpack.c.h.b16 %v790
      %v801 = vunpack.c.l.b16 %v791
      %v802 = vunpack.c.h.b16 %v791
      %v803 = vunpack.c.l.b16 %v792
      %v804 = vunpack.c.h.b16 %v792
      %v805 = vpack.c.b16 %v797, %v797
      %v806 = vpack.c.b16 %v798, %v798
      %v807 = vpack.c.b16 %v799, %v799
      %v808 = vpack.c.b16 %v800, %v800
      %v809 = vpack.c.b16 %v801, %v801
      %v810 = vpack.c.b16 %v802, %v802
      %v811 = vpack.c.b16 %v803, %v803
      %v812 = vpack.c.b16 %v804, %v804
      %vm821 = vcmask 125952
      %822 = vst.msk [vmem:[%s365] sm:$0xf] %vm821, %v805
      %823 = vst.msk [vmem:[%s365 + $0x4] sm:$0xf] %vm821, %v806
      %824 = vst.msk [vmem:[%s365 + $0x8] sm:$0xf] %vm821, %v807
      %825 = vst.msk [vmem:[%s365 + $0xc] sm:$0xf] %vm821, %v808
      %826 = vst.msk [vmem:[%s365 + $0x10] sm:$0xf] %vm821, %v809
      %827 = vst.msk [vmem:[%s365 + $0x14] sm:$0xf] %vm821, %v810
      %828 = vst.msk [vmem:[%s365 + $0x18] sm:$0xf] %vm821, %v811
      %829 = vst.msk [vmem:[%s365 + $0x1c] sm:$0xf] %vm821, %v812
      %v830 = vsub.f32 %v759, %v370
      %v831 = vsub.f32 %v762, %v371
      %v832 = vsub.f32 %v767, %v372
      %v833 = vsub.f32 %v770, %v373
      %v834 = vsub.f32 %v775, %v374
      %v835 = vsub.f32 %v778, %v375
      %v836 = vsub.f32 %v783, %v376
      %v837 = vsub.f32 %v786, %v377
      %v838 = vmul.f32 %v830, %v830
      %v839 = vmul.f32 %v831, %v831
      %v840 = vmul.f32 %v832, %v832
      %v841 = vmul.f32 %v833, %v833
      %v842 = vmul.f32 %v834, %v834
      %v843 = vmul.f32 %v835, %v835
      %v844 = vmul.f32 %v836, %v836
      %v845 = vmul.f32 %v837, %v837
      %v846 = vsel %vm392, %v838, 0.0
      %v847 = vsel %vm392, %v839, 0.0
      %v848 = vadd.f32 %v846, %v847
      %v849 = vsel %vm392, %v840, 0.0
      %v850 = vadd.f32 %v848, %v849
      %v851 = vsel %vm392, %v841, 0.0
      %v852 = vadd.f32 %v850, %v851
      %v853 = vsel %vm392, %v842, 0.0
      %v854 = vadd.f32 %v852, %v853
      %v855 = vsel %vm392, %v843, 0.0
      %v856 = vadd.f32 %v854, %v855
      %v857 = vsel %vm392, %v844, 0.0
      %v858 = vadd.f32 %v856, %v857
      %v859 = vsel %vm392, %v845, 0.0
      %v860 = vadd.f32 %v858, %v859
      %861 = vadd.xlane.f32.xlu0 %v860
      %v862 = vpop.xlane.xlu0 %861
      %v863 = vrot.slane %v862, 4
      %v864 = vadd.f32 %v862, %v863
      %v865 = vrot.slane %v864, 2
      %v866 = vadd.f32 %v864, %v865
      %v867 = vrot.slane %v866, 1
      %v868 = vadd.f32 %v866, %v867
      %s869 = vtos %v868
      %v870 = vstv %s869
      %871 = vst [vmem:[%s368] sm:$0x1] %v870
      %p872 = scmp.lt.s32.totalorder %s20, 1
      %s873 = scalar_select %p872, %s20, 1
      %s874 = smul.addr %s873, 8
      %s875 = smul.addr %s874, 4
      %s876 = scalar_lea.vmem %s7, %s875
      %p877 = scmp.lt.s32.totalorder %s20, 1
      %s878 = scalar_select %p877, %s20, 1
      %s879 = scalar_lea.vmem %s8, %s878
      // Predicated region
      $region49: #{dtls_forward.1} parent=47 // pred_check
        %p880 = pneg %p205
      $region50: #{dtls_forward.1} parent=47 // pred_check_branch
        %882 = sbr.rel (%p880) target = $region52
      $region51: #{dtls_forward.1} parent=47 // pred_region
        _
      $region52: #{dtls_forward.1} parent=47 // pred_fallthru
        _
      // Predicated region
      $region53: #{dtls_forward.1} parent=47 // pred_check
        %p883 = pneg %p231
      $region54: #{dtls_forward.1} parent=47 // pred_check_branch
        %885 = sbr.rel (%p883) target = $region56
      $region55: #{dtls_forward.1} parent=47 // pred_region
        _
      $region56: #{dtls_forward.1} parent=47 // pred_fallthru
        _
    $region48: #{dtls_forward.1} parent=5 // pred_fallthru
      _
    %p886 = scmp.le.s32.totalorder 2, %s15
    // Predicated region
    $region57: #{dtls_forward.1} parent=5 // pred_check
      %p887 = pneg %p886
    $region58: #{dtls_forward.1} parent=5 // pred_check_branch
      %889 = sbr.rel (%p887) target = $region60
    $region59: #{dtls_forward.1} parent=5 // pred_region
      %s890 = ssub.s32 %s15, 2
      // Predicated region
      $region61: #{dtls_forward.1} parent=59 // pred_check
        %p891 = pneg %p211
      $region62: #{dtls_forward.1} parent=59 // pred_check_branch
        %893 = sbr.rel (%p891) target = $region64
      $region63: #{dtls_forward.1} parent=59 // pred_region
        %p894 = scmp.lt.s32.totalorder %s21, 1
        %s895 = scalar_select %p894, %s21, 1
        %s896 = smul.addr %s895, 8
        %s897 = smul.addr %s896, 4
        %s898 = scalar_lea.vmem %s7, %s897
      $region64: #{dtls_forward.1} parent=59 // pred_fallthru
        _
      // Predicated region
      $region65: #{dtls_forward.1} parent=59 // pred_check
        %p899 = pneg %p237
      $region66: #{dtls_forward.1} parent=59 // pred_check_branch
        %901 = sbr.rel (%p899) target = $region68
      $region67: #{dtls_forward.1} parent=59 // pred_region
        %p902 = scmp.lt.s32.totalorder %s21, 1
        %s903 = scalar_select %p902, %s21, 1
        %s904 = scalar_lea.vmem %s8, %s903
      $region68: #{dtls_forward.1} parent=59 // pred_fallthru
        _
    $region60: #{dtls_forward.1} parent=5 // pred_fallthru
      _
  $region6: #{dtls_forward.1} parent=0 // loop_footer
    %s19 = sadd.s32 1, %s15
  $region7: #{dtls_forward.1} parent=0 // loop_footer_branch
    %14 = sbr.rel target = $region3
  $region8: #{dtls_forward.1} parent=0 // loop_exit
    _

</llo_original>
